<compile_context>
chip_gen: v6e
topology: v6e:2x2x1
jax: 0.10.0
libtpu: 0.0.40
codegen_flags: <defaults>
</compile_context>

<pallas_src>
import jax
import jax.numpy as jnp
from jax.experimental import pallas as pl
from jax.experimental.pallas import tpu as pltpu


def _recursive_filter_kernel(w, n_frames, rows_per_block):
    """Kernel factory: filter weight, frame count and block row count baked in."""
    w = float(w)
    omw = 1.0 - w

    def kernel(x_ref, o_ref):
        # x_ref / o_ref blocks: (rows_per_block, n_frames, lane_tile)

        def row_body(m, carry):
            # Frame 0: y = x.  Carry `y` lives in vector registers.
            y = x_ref[pl.ds(m, 1), 0:1, :].astype(jnp.float32)      # (1, 1, Tl)
            o_ref[pl.ds(m, 1), 0:1, :] = y.astype(o_ref.dtype)
            # Frames 1..N-1: statically unrolled recursion, one store per frame.
            for i in range(1, n_frames):
                xi = x_ref[pl.ds(m, 1), i:i + 1, :].astype(jnp.float32)
                y = w * xi + omw * y
                o_ref[pl.ds(m, 1), i:i + 1, :] = y.astype(o_ref.dtype)
            return carry

        jax.lax.fori_loop(0, rows_per_block, row_body, 0)

    return kernel


def recursive_filter(x, w=0.2):
    """x: (B, C, N, H, W)  ->  (B, C, N, H, W), same dtype as x."""
    B, C, N, H, W = x.shape
    M = B * C
    L = H * W

    # Free, contiguous reshape — no transpose, no extra HBM pass.
    x_k = x.reshape(M, N, L)

    itemsize = jnp.dtype(x.dtype).itemsize

    # Lane tile: multiple of 128 (unmasked, lane-dense vst) or the full dim.
    if L % 128 == 0:
        Tl = min(L, 1024)
    else:
        Tl = L  # ragged lane dim must be taken whole

    # Rows per block: target ~2 MiB per input block (per-step overhead
    # amortization), bounded by M.  Double-buffered in+out stays well under
    # the scoped VMEM limit on v5e/v6e/v7x.
    row_bytes = N * Tl * itemsize
    target_block_bytes = 2 * 1024 * 1024
    Tm = max(1, min(M, target_block_bytes // max(row_bytes, 1)))

    grid = (pl.cdiv(M, Tm), pl.cdiv(L, Tl))

    out_k = pl.pallas_call(
        _recursive_filter_kernel(w, N, Tm),
        out_shape=jax.ShapeDtypeStruct((M, N, L), x.dtype),
        grid=grid,
        in_specs=[pl.BlockSpec((Tm, N, Tl), lambda i, j: (i, 0, j))],
        out_specs=pl.BlockSpec((Tm, N, Tl), lambda i, j: (i, 0, j)),
        compiler_params=pltpu.CompilerParams(
            dimension_semantics=("parallel", "parallel"),
            vmem_limit_bytes=32 * 1024 * 1024,
        ),
    )(x_k)

    return out_k.reshape(B, C, N, H, W)


def _reference(x, w=0.2):
    """Pure-JAX reference matching the PyTorch loop semantics."""
    def step(prev, xi):
        y = w * xi + (1.0 - w) * prev
        return y, y

    x_t = jnp.moveaxis(x, 2, 0)                 # (N, B, C, H, W)
    y0 = x_t[0]
    _, rest = jax.lax.scan(step, y0, x_t[1:])
    y = jnp.concatenate([y0[None], rest], axis=0)
    return jnp.moveaxis(y, 0, 2)


if __name__ == "__main__":
    key = jax.random.PRNGKey(0)
    # (B, C, N, H, W) — N is the recursive (frame) axis.
    B, C, N, H, W = 2, 4, 8, 16, 16
    x = jax.random.normal(key, (B, C, N, H, W), dtype=jnp.float32)

    out = recursive_filter(x, w=0.2)
    out = jax.block_until_ready(out)

    ref = _reference(x, w=0.2)
    assert out.shape == x.shape and out.dtype == x.dtype
    assert jnp.allclose(out, ref, atol=1e-5, rtol=1e-5)

    print("KERNEL_OK")
</pallas_src>

<mosaic_0001>
module attributes {stable_mosaic.version = 11 : i64} {
  func.func @kernel(%arg0: i32, %arg1: i32, %arg2: memref<8x8x256xf32, #tpu.memory_space<vmem>>, %arg3: memref<8x8x256xf32, #tpu.memory_space<vmem>>) attributes {dimension_semantics = [#tpu.dimension_semantics<parallel>, #tpu.dimension_semantics<parallel>], iteration_bounds = array<i64: 1, 1>, scalar_prefetch = 0 : i64, scratch_operands = 0 : i64, tpu.core_type = #tpu.core_type<tc>, window_params = [{transform_indices = @transform_0, window_bounds = array<i64: 8, 8, 256>}, {transform_indices = @transform_1, window_bounds = array<i64: 8, 8, 256>}]} {
    %c0_i32 = arith.constant 0 : i32
    %c8_i32 = arith.constant 8 : i32
    %0 = arith.addi %c0_i32, %c8_i32 : i32
    %c1_i32 = arith.constant 1 : i32
    scf.for %arg4 = %c0_i32 to %0 step %c1_i32  : i32 {
      %1 = arith.index_cast %arg4 : i32 to index
      %c0 = arith.constant 0 : index
      %c0_1 = arith.constant 0 : index
      %2 = vector.load %arg2[%1, %c0, %c0_1] : memref<8x8x256xf32, #tpu.memory_space<vmem>>, vector<1x1x256xf32>
      %3 = arith.index_cast %arg4 : i32 to index
      %c0_2 = arith.constant 0 : index
      %c0_3 = arith.constant 0 : index
      %4 = vector.load %arg3[%3, %c0_2, %c0_3] : memref<8x8x256xf32, #tpu.memory_space<vmem>>, vector<1x1x256xf32>
      tpu.vector_store %arg3[%3, %c0_2, %c0_3], %2 {strides = array<i32>} : memref<8x8x256xf32, #tpu.memory_space<vmem>>, vector<1x1x256xf32>,
      %5 = arith.index_cast %arg4 : i32 to index
      %c1 = arith.constant 1 : index
      %c0_4 = arith.constant 0 : index
      %6 = vector.load %arg2[%5, %c1, %c0_4] : memref<8x8x256xf32, #tpu.memory_space<vmem>>, vector<1x1x256xf32>
      %cst = arith.constant 2.000000e-01 : f32
      %7 = vector.broadcast %cst : f32 to vector<1x1x256xf32>
      %8 = arith.mulf %7, %6 : vector<1x1x256xf32>
      %cst_5 = arith.constant 8.000000e-01 : f32
      %9 = vector.broadcast %cst_5 : f32 to vector<1x1x256xf32>
      %10 = arith.mulf %9, %2 : vector<1x1x256xf32>
      %11 = arith.addf %8, %10 : vector<1x1x256xf32>
      %12 = arith.index_cast %arg4 : i32 to index
      %c1_6 = arith.constant 1 : index
      %c0_7 = arith.constant 0 : index
      %13 = vector.load %arg3[%12, %c1_6, %c0_7] : memref<8x8x256xf32, #tpu.memory_space<vmem>>, vector<1x1x256xf32>
      tpu.vector_store %arg3[%12, %c1_6, %c0_7], %11 {strides = array<i32>} : memref<8x8x256xf32, #tpu.memory_space<vmem>>, vector<1x1x256xf32>,
      %14 = arith.index_cast %arg4 : i32 to index
      %c2 = arith.constant 2 : index
      %c0_8 = arith.constant 0 : index
      %15 = vector.load %arg2[%14, %c2, %c0_8] : memref<8x8x256xf32, #tpu.memory_space<vmem>>, vector<1x1x256xf32>
      %cst_9 = arith.constant 2.000000e-01 : f32
      %16 = vector.broadcast %cst_9 : f32 to vector<1x1x256xf32>
      %17 = arith.mulf %16, %15 : vector<1x1x256xf32>
      %cst_10 = arith.constant 8.000000e-01 : f32
      %18 = vector.broadcast %cst_10 : f32 to vector<1x1x256xf32>
      %19 = arith.mulf %18, %11 : vector<1x1x256xf32>
      %20 = arith.addf %17, %19 : vector<1x1x256xf32>
      %21 = arith.index_cast %arg4 : i32 to index
      %c2_11 = arith.constant 2 : index
      %c0_12 = arith.constant 0 : index
      %22 = vector.load %arg3[%21, %c2_11, %c0_12] : memref<8x8x256xf32, #tpu.memory_space<vmem>>, vector<1x1x256xf32>
      tpu.vector_store %arg3[%21, %c2_11, %c0_12], %20 {strides = array<i32>} : memref<8x8x256xf32, #tpu.memory_space<vmem>>, vector<1x1x256xf32>,
      %23 = arith.index_cast %arg4 : i32 to index
      %c3 = arith.constant 3 : index
      %c0_13 = arith.constant 0 : index
      %24 = vector.load %arg2[%23, %c3, %c0_13] : memref<8x8x256xf32, #tpu.memory_space<vmem>>, vector<1x1x256xf32>
      %cst_14 = arith.constant 2.000000e-01 : f32
      %25 = vector.broadcast %cst_14 : f32 to vector<1x1x256xf32>
      %26 = arith.mulf %25, %24 : vector<1x1x256xf32>
      %cst_15 = arith.constant 8.000000e-01 : f32
      %27 = vector.broadcast %cst_15 : f32 to vector<1x1x256xf32>
      %28 = arith.mulf %27, %20 : vector<1x1x256xf32>
      %29 = arith.addf %26, %28 : vector<1x1x256xf32>
      %30 = arith.index_cast %arg4 : i32 to index
      %c3_16 = arith.constant 3 : index
      %c0_17 = arith.constant 0 : index
      %31 = vector.load %arg3[%30, %c3_16, %c0_17] : memref<8x8x256xf32, #tpu.memory_space<vmem>>, vector<1x1x256xf32>
      tpu.vector_store %arg3[%30, %c3_16, %c0_17], %29 {strides = array<i32>} : memref<8x8x256xf32, #tpu.memory_space<vmem>>, vector<1x1x256xf32>,
      %32 = arith.index_cast %arg4 : i32 to index
      %c4 = arith.constant 4 : index
      %c0_18 = arith.constant 0 : index
      %33 = vector.load %arg2[%32, %c4, %c0_18] : memref<8x8x256xf32, #tpu.memory_space<vmem>>, vector<1x1x256xf32>
      %cst_19 = arith.constant 2.000000e-01 : f32
      %34 = vector.broadcast %cst_19 : f32 to vector<1x1x256xf32>
      %35 = arith.mulf %34, %33 : vector<1x1x256xf32>
      %cst_20 = arith.constant 8.000000e-01 : f32
      %36 = vector.broadcast %cst_20 : f32 to vector<1x1x256xf32>
      %37 = arith.mulf %36, %29 : vector<1x1x256xf32>
      %38 = arith.addf %35, %37 : vector<1x1x256xf32>
      %39 = arith.index_cast %arg4 : i32 to index
      %c4_21 = arith.constant 4 : index
      %c0_22 = arith.constant 0 : index
      %40 = vector.load %arg3[%39, %c4_21, %c0_22] : memref<8x8x256xf32, #tpu.memory_space<vmem>>, vector<1x1x256xf32>
      tpu.vector_store %arg3[%39, %c4_21, %c0_22], %38 {strides = array<i32>} : memref<8x8x256xf32, #tpu.memory_space<vmem>>, vector<1x1x256xf32>,
      %41 = arith.index_cast %arg4 : i32 to index
      %c5 = arith.constant 5 : index
      %c0_23 = arith.constant 0 : index
      %42 = vector.load %arg2[%41, %c5, %c0_23] : memref<8x8x256xf32, #tpu.memory_space<vmem>>, vector<1x1x256xf32>
      %cst_24 = arith.constant 2.000000e-01 : f32
      %43 = vector.broadcast %cst_24 : f32 to vector<1x1x256xf32>
      %44 = arith.mulf %43, %42 : vector<1x1x256xf32>
      %cst_25 = arith.constant 8.000000e-01 : f32
      %45 = vector.broadcast %cst_25 : f32 to vector<1x1x256xf32>
      %46 = arith.mulf %45, %38 : vector<1x1x256xf32>
      %47 = arith.addf %44, %46 : vector<1x1x256xf32>
      %48 = arith.index_cast %arg4 : i32 to index
      %c5_26 = arith.constant 5 : index
      %c0_27 = arith.constant 0 : index
      %49 = vector.load %arg3[%48, %c5_26, %c0_27] : memref<8x8x256xf32, #tpu.memory_space<vmem>>, vector<1x1x256xf32>
      tpu.vector_store %arg3[%48, %c5_26, %c0_27], %47 {strides = array<i32>} : memref<8x8x256xf32, #tpu.memory_space<vmem>>, vector<1x1x256xf32>,
      %50 = arith.index_cast %arg4 : i32 to index
      %c6 = arith.constant 6 : index
      %c0_28 = arith.constant 0 : index
      %51 = vector.load %arg2[%50, %c6, %c0_28] : memref<8x8x256xf32, #tpu.memory_space<vmem>>, vector<1x1x256xf32>
      %cst_29 = arith.constant 2.000000e-01 : f32
      %52 = vector.broadcast %cst_29 : f32 to vector<1x1x256xf32>
      %53 = arith.mulf %52, %51 : vector<1x1x256xf32>
      %cst_30 = arith.constant 8.000000e-01 : f32
      %54 = vector.broadcast %cst_30 : f32 to vector<1x1x256xf32>
      %55 = arith.mulf %54, %47 : vector<1x1x256xf32>
      %56 = arith.addf %53, %55 : vector<1x1x256xf32>
      %57 = arith.index_cast %arg4 : i32 to index
      %c6_31 = arith.constant 6 : index
      %c0_32 = arith.constant 0 : index
      %58 = vector.load %arg3[%57, %c6_31, %c0_32] : memref<8x8x256xf32, #tpu.memory_space<vmem>>, vector<1x1x256xf32>
      tpu.vector_store %arg3[%57, %c6_31, %c0_32], %56 {strides = array<i32>} : memref<8x8x256xf32, #tpu.memory_space<vmem>>, vector<1x1x256xf32>,
      %59 = arith.index_cast %arg4 : i32 to index
      %c7 = arith.constant 7 : index
      %c0_33 = arith.constant 0 : index
      %60 = vector.load %arg2[%59, %c7, %c0_33] : memref<8x8x256xf32, #tpu.memory_space<vmem>>, vector<1x1x256xf32>
      %cst_34 = arith.constant 2.000000e-01 : f32
      %61 = vector.broadcast %cst_34 : f32 to vector<1x1x256xf32>
      %62 = arith.mulf %61, %60 : vector<1x1x256xf32>
      %cst_35 = arith.constant 8.000000e-01 : f32
      %63 = vector.broadcast %cst_35 : f32 to vector<1x1x256xf32>
      %64 = arith.mulf %63, %56 : vector<1x1x256xf32>
      %65 = arith.addf %62, %64 : vector<1x1x256xf32>
      %66 = arith.index_cast %arg4 : i32 to index
      %c7_36 = arith.constant 7 : index
      %c0_37 = arith.constant 0 : index
      %67 = vector.load %arg3[%66, %c7_36, %c0_37] : memref<8x8x256xf32, #tpu.memory_space<vmem>>, vector<1x1x256xf32>
      tpu.vector_store %arg3[%66, %c7_36, %c0_37], %65 {strides = array<i32>} : memref<8x8x256xf32, #tpu.memory_space<vmem>>, vector<1x1x256xf32>,
    }
    %c8_i32_0 = arith.constant 8 : i32
    return
  }
  func.func @transform_0(%arg0: i32, %arg1: i32) -> (i32, i32, i32) {
    %c0_i32 = arith.constant 0 : i32
    %c0_i32_0 = arith.constant 0 : i32
    return %arg0, %c0_i32, %arg1 : i32, i32, i32
  }
  func.func @transform_1(%arg0: i32, %arg1: i32) -> (i32, i32, i32) {
    %c0_i32 = arith.constant 0 : i32
    %c0_i32_0 = arith.constant 0 : i32
    return %arg0, %c0_i32, %arg1 : i32, i32, i32
  }
}

</mosaic_0001>

<llo_original>
// kernel: tpu_custom_call.1
$region0: #{tpu_custom_call.1}
  #allocation0 [shape = 'u32[]', space=smem, size = 0x4, offset = 0x4, fixed_abs, tag = 'smem constant byte address 0x4 - core index']
  #allocation1 [shape = 'u32[144,128]{1,0:T(1,128)}', space=vmem, size = 0x12000, scoped, tag = 'internal scratch']
  %s0 = inlined_call_operand.hbm [shape: f32[8,8,256], index: 0, kind: input, shape index: {}]
  %s1 = inlined_call_operand.hbm [shape: f32[8,8,256], index: 1, kind: output, shape index: {}]
  %s2 = sld [smem:[#allocation0]]
  $region25: #{tpu_custom_call.1} parent=0
    _
  %s4 = ssub.s32 1, %s2
  %s5 = scalar_select 0, %s4, %s2
  $region1: #{tpu_custom_call.1} parent=0
    #allocation2 [shape = 'u8[65536]{0}', space=vmem, size = 0x10000, scoped, tag = 'input window, operand 0, single buffered']
    #allocation3 [shape = 's32[1]{0}', space=sflag, size = 0x4, scoped, tag = 'scoped memory for tpu_custom_call.1']
    #allocation4 [shape = 's32[1]{0}', space=sflag, size = 0x4, scoped, tag = 'scoped memory for tpu_custom_call.1']
    #allocation5 [shape = 'u8[65536]{0}', space=vmem, size = 0x10000, scoped, tag = 'output window, operand 0, single buffered']
    %6 = vsyncpa [#allocation3], 0
    %7 = vsyncpa [#allocation4], 0
    // Predicated region
    $region2: #{tpu_custom_call.1} parent=1 // pred_check
      _
    $region3: #{tpu_custom_call.1} parent=1 // pred_check_branch
      %9 = sbr.rel (0) target = $region5
    $region4: #{tpu_custom_call.1} parent=1 // pred_region
      %s11 = ssub.s32 2048, 2048
      %12 = vsyncadd [#allocation3], %s11
      %s13 = sshll.u32 [#allocation2], 4
      %s14 = int_to_ptr.vmem [resolvable:$true] %s13
      %19 = dma.hbm_to_vmem [thread:$0]  %s0, 2048, %s14, [#allocation3], 256, 256, 16
    $region5: #{tpu_custom_call.1} parent=1 // pred_fallthru
      _
    // Predicated region
    $region6: #{tpu_custom_call.1} parent=1 // pred_check
      _
    $region7: #{tpu_custom_call.1} parent=1 // pred_check_branch
      %21 = sbr.rel (0) target = $region9
    $region8: #{tpu_custom_call.1} parent=1 // pred_region
      %22 = dma.done [#allocation3], 2048
    $region9: #{tpu_custom_call.1} parent=1 // pred_fallthru
      _
    loop: start=0, step=1, limit=8
    $region10: #{tpu_custom_call.1} parent=1 // loop_pre_header
      _
    $region11: #{tpu_custom_call.1} parent=1 // loop_header
      %s24 = sphi 0, %s28
      %p25 = scmp.ge.s32.totalorder %s24, 8
    $region12: #{tpu_custom_call.1} parent=1 // loop_header_branch
      %27 = sbr.rel (%p25) target = $region16
    $region13: #{tpu_custom_call.1} parent=1 // loop_body
      %s29 = smul.u32 %s24, 2
      %s30 = smul.addr %s29, 8
      %s31 = scalar_lea.vmem [#allocation2], %s30
      %v32 = vld [vmem:[%s31] ss:$8 sm:$0x3]
      %s33 = smul.addr %s29, 8
      %s34 = scalar_lea.vmem [#allocation5], %s33
      %v35 = vlaneseq
      %vm36 = vcmp.ge.s32.totalorder %v35, 0
      %vm37 = vcmp.lt.s32.totalorder %v35, 256
      %vm38 = vmand %vm36, %vm37
      %39 = vst.msk [vmem:[%s34] ss:$8 sm:$0x3] %vm38, %v32
      %40 = vst.msk [vmem:[%s34] ss:$8 sm:$0x0] %vm38, %v32
      %s41 = scalar_lea.vmem %s31, 1 [#allocation2]
      %v42 = vld [vmem:[%s41] ss:$8 sm:$0x3]
      %v43 = vmul.f32 %v42, 0.2
      %v44 = vmul.f32 %v32, 0.8
      %v45 = vadd.f32 %v43, %v44
      %s46 = scalar_lea.vmem %s34, 1 [#allocation5]
      %47 = vst.msk [vmem:[%s46] ss:$8 sm:$0x3] %vm38, %v45
      %48 = vst.msk [vmem:[%s46] ss:$8 sm:$0x0] %vm38, %v45
      %s49 = scalar_lea.vmem %s31, 2 [#allocation2]
      %v50 = vld [vmem:[%s49] ss:$8 sm:$0x3]
      %v51 = vmul.f32 %v50, 0.2
      %v52 = vmul.f32 %v45, 0.8
      %v53 = vadd.f32 %v51, %v52
      %s54 = scalar_lea.vmem %s34, 2 [#allocation5]
      %55 = vst.msk [vmem:[%s54] ss:$8 sm:$0x3] %vm38, %v53
      %56 = vst.msk [vmem:[%s54] ss:$8 sm:$0x0] %vm38, %v53
      %s57 = scalar_lea.vmem %s31, 3 [#allocation2]
      %v58 = vld [vmem:[%s57] ss:$8 sm:$0x3]
      %v59 = vmul.f32 %v58, 0.2
      %v60 = vmul.f32 %v53, 0.8
      %v61 = vadd.f32 %v59, %v60
      %s62 = scalar_lea.vmem %s34, 3 [#allocation5]
      %63 = vst.msk [vmem:[%s62] ss:$8 sm:$0x3] %vm38, %v61
      %64 = vst.msk [vmem:[%s62] ss:$8 sm:$0x0] %vm38, %v61
      %s65 = scalar_lea.vmem %s31, 4 [#allocation2]
      %v66 = vld [vmem:[%s65] ss:$8 sm:$0x3]
      %v67 = vmul.f32 %v66, 0.2
      %v68 = vmul.f32 %v61, 0.8
      %v69 = vadd.f32 %v67, %v68
      %s70 = scalar_lea.vmem %s34, 4 [#allocation5]
      %71 = vst.msk [vmem:[%s70] ss:$8 sm:$0x3] %vm38, %v69
      %72 = vst.msk [vmem:[%s70] ss:$8 sm:$0x0] %vm38, %v69
      %s73 = scalar_lea.vmem %s31, 5 [#allocation2]
      %v74 = vld [vmem:[%s73] ss:$8 sm:$0x3]
      %v75 = vmul.f32 %v74, 0.2
      %v76 = vmul.f32 %v69, 0.8
      %v77 = vadd.f32 %v75, %v76
      %s78 = scalar_lea.vmem %s34, 5 [#allocation5]
      %79 = vst.msk [vmem:[%s78] ss:$8 sm:$0x3] %vm38, %v77
      %80 = vst.msk [vmem:[%s78] ss:$8 sm:$0x0] %vm38, %v77
      %s81 = scalar_lea.vmem %s31, 6 [#allocation2]
      %v82 = vld [vmem:[%s81] ss:$8 sm:$0x3]
      %v83 = vmul.f32 %v82, 0.2
      %v84 = vmul.f32 %v77, 0.8
      %v85 = vadd.f32 %v83, %v84
      %s86 = scalar_lea.vmem %s34, 6 [#allocation5]
      %87 = vst.msk [vmem:[%s86] ss:$8 sm:$0x3] %vm38, %v85
      %88 = vst.msk [vmem:[%s86] ss:$8 sm:$0x0] %vm38, %v85
      %s89 = scalar_lea.vmem %s31, 7 [#allocation2]
      %v90 = vld [vmem:[%s89] ss:$8 sm:$0x3]
      %v91 = vmul.f32 %v90, 0.2
      %v92 = vmul.f32 %v85, 0.8
      %v93 = vadd.f32 %v91, %v92
      %s94 = scalar_lea.vmem %s34, 7 [#allocation5]
      %95 = vst.msk [vmem:[%s94] ss:$8 sm:$0x3] %vm38, %v93
      %96 = vst.msk [vmem:[%s94] ss:$8 sm:$0x0] %vm38, %v93
    $region14: #{tpu_custom_call.1} parent=1 // loop_footer
      %s28 = sadd.s32 1, %s24
    $region15: #{tpu_custom_call.1} parent=1 // loop_footer_branch
      %23 = sbr.rel target = $region11
    $region16: #{tpu_custom_call.1} parent=1 // loop_exit
      _
    // Predicated region
    $region17: #{tpu_custom_call.1} parent=1 // pred_check
      _
    $region18: #{tpu_custom_call.1} parent=1 // pred_check_branch
      %98 = sbr.rel (0) target = $region20
    $region19: #{tpu_custom_call.1} parent=1 // pred_region
      %s100 = ssub.s32 2048, 2048
      %101 = vsyncadd [#allocation4], %s100
      %s102 = sshll.u32 [#allocation5], 4
      %s103 = int_to_ptr.vmem [resolvable:$true] %s102
      %108 = dma.vmem_to_hbm [thread:$0]  %s103, 2048, %s1, [#allocation4], 256, 256, 16
    $region20: #{tpu_custom_call.1} parent=1 // pred_fallthru
      _
    // Predicated region
    $region21: #{tpu_custom_call.1} parent=1 // pred_check
      _
    $region22: #{tpu_custom_call.1} parent=1 // pred_check_branch
      %110 = sbr.rel (0) target = $region24
    $region23: #{tpu_custom_call.1} parent=1 // pred_region
      %111 = dma.done [#allocation4], 2048
    $region24: #{tpu_custom_call.1} parent=1 // pred_fallthru
      _
    %112 = vsyncpa [#allocation3], 1
    %113 = vsyncpa [#allocation4], 1

</llo_original>
